<compile_context>
chip_gen: v7x
topology: tpu7x:2x2x1
jax: 0.10.0
libtpu: 0.0.40
codegen_flags: <defaults>
</compile_context>

<pallas_src>
import math

import jax
import jax.numpy as jnp
import numpy as np
from jax.experimental import pallas as pl
from jax.experimental.pallas import tpu as pltpu


# ----------------------------- config ---------------------------------------
NUM_CLASSES = 3
NO = NUM_CLASSES + 5                      # outputs per anchor
ANCHORS = [[10, 13, 16, 30, 33, 23],
           [30, 61, 62, 45, 59, 119],
           [116, 90, 156, 198, 373, 326]]
STRIDES = [8.0, 16.0, 32.0]
IN_CHS = (16, 32, 64)                     # width=1.0
NA = len(ANCHORS[0]) // 2                 # 3 anchors per layer
NUM_LAYERS = len(ANCHORS)
COUT = NA * NO                            # 24 conv output channels per layer
LANES = 128
MAX_TILE = 1024                           # target spatial tile (lanes) per grid step


def check_anchor_order(anchors, strides):
    # anchors: (nl, na, 2) already divided by stride
    a = anchors.prod(-1).mean(-1)          # mean anchor area per layer
    da = a[-1] - a[0]
    ds = strides[-1] - strides[0]
    if np.sign(da) != np.sign(ds):
        anchors = anchors[::-1].copy()
    return anchors


def init_params(key):
    """Deterministic synthetic weights + yolov5-style bias init."""
    params = []
    for i, cin in enumerate(IN_CHS):
        key, sub = jax.random.split(key)
        cout = NA * NO
        w = (jax.random.normal(sub, (cout, cin, 1, 1), jnp.float32) * 0.01)
        b = np.zeros((NA, NO), np.float32)
        s = STRIDES[i]
        b[:, 4] += math.log(8.0 / (640.0 / s) ** 2)
        b[:, 5:] += math.log(0.6 / (NUM_CLASSES - 0.999999))
        params.append((w, jnp.asarray(b.reshape(-1))))
    return params


# ----------------------------- Pallas kernel --------------------------------
def _head_layer_kernel(x_ref, w_ref, const_ref, grid_ref, raw_ref, dec_ref):
    """One (batch, spatial-tile) step of one detection layer.

    x_ref:     (cin, T)   activation tile, channels x flattened pixels
    w_ref:     (COUT, cin) 1x1 conv weight
    const_ref: (COUT, 5)   per-channel [bias, lin_mul, wh_scale, sel_x, sel_y]
    grid_ref:  (2, T)      [(gx-0.5)*stride ; (gy-0.5)*stride] per pixel
    raw_ref:   (COUT, T)   raw conv output (returned as x list)
    dec_ref:   (COUT, T)   decoded boxes (returned as z)
    """
    raw = jnp.dot(w_ref[...], x_ref[...],
                  preferred_element_type=jnp.float32) + const_ref[:, 0:1]
    sig = jax.nn.sigmoid(raw)
    # decode: sig*(whs*sig + mul) + selx*gx + sely*gy   (no iota / selects)
    add = (const_ref[:, 3:4] * grid_ref[0:1, :]
           + const_ref[:, 4:5] * grid_ref[1:2, :])
    dec = sig * (const_ref[:, 2:3] * sig + const_ref[:, 1:2]) + add
    raw_ref[...] = raw
    dec_ref[...] = dec


def _choose_tile(hw, max_t=MAX_TILE):
    """Largest multiple-of-128 divisor of hw that is <= max_t, else full hw."""
    t = (max_t // LANES) * LANES
    while t >= LANES:
        if hw % t == 0:
            return t
        t -= LANES
    return hw


def _layer_forward(x, w, b, stride, anchor_pix):
    """Run the fused conv+decode kernel for one detection layer."""
    B, cin, ny, nx = x.shape
    hw = ny * nx
    t = _choose_tile(hw)
    n_t = hw // t

    xf = x.reshape(B, cin, hw)            # contiguous collapse: no data movement
    w2 = w.reshape(COUT, cin)

    # per-channel decode constants
    mul = np.zeros((COUT, 1), np.float32)
    whs = np.zeros((COUT, 1), np.float32)
    selx = np.zeros((COUT, 1), np.float32)
    sely = np.zeros((COUT, 1), np.float32)
    for a in range(NA):
        mul[a * NO + 0] = 2.0 * stride
        mul[a * NO + 1] = 2.0 * stride
        whs[a * NO + 2] = 4.0 * float(anchor_pix[a, 0])
        whs[a * NO + 3] = 4.0 * float(anchor_pix[a, 1])
        mul[a * NO + 4:(a + 1) * NO] = 1.0
        selx[a * NO + 0] = 1.0
        sely[a * NO + 1] = 1.0
    const = jnp.concatenate(
        [b.reshape(COUT, 1), jnp.asarray(mul), jnp.asarray(whs),
         jnp.asarray(selx), jnp.asarray(sely)], axis=1)          # (COUT, 5)

    # per-pixel (grid - 0.5) * stride offsets, batch/anchor independent
    gy, gx = np.meshgrid(np.arange(ny, dtype=np.float32),
                         np.arange(nx, dtype=np.float32), indexing='ij')
    gridtab = jnp.asarray(np.stack([(gx.reshape(-1) - 0.5) * stride,
                                    (gy.reshape(-1) - 0.5) * stride],
                                   axis=0).astype(np.float32))   # (2, hw)

    raw, dec = pl.pallas_call(
        _head_layer_kernel,
        out_shape=(jax.ShapeDtypeStruct((B, COUT, hw), jnp.float32),
                   jax.ShapeDtypeStruct((B, COUT, hw), jnp.float32)),
        grid_spec=pltpu.PrefetchScalarGridSpec(
            num_scalar_prefetch=0,
            grid=(B, n_t),
            in_specs=[
                pl.BlockSpec((None, cin, t), lambda bi, ti: (bi, 0, ti)),
                pl.BlockSpec((COUT, cin), lambda bi, ti: (0, 0)),
                pl.BlockSpec((COUT, 5), lambda bi, ti: (0, 0)),
                pl.BlockSpec((2, t), lambda bi, ti: (0, ti)),
            ],
            out_specs=[
                pl.BlockSpec((None, COUT, t), lambda bi, ti: (bi, 0, ti)),
                pl.BlockSpec((None, COUT, t), lambda bi, ti: (bi, 0, ti)),
            ]),
        compiler_params=pltpu.CompilerParams(
            dimension_semantics=("parallel", "parallel")),
    )(xf, w2, const, gridtab)
    return raw, dec


# ----------------------------- wrapper ---------------------------------------
def yolo_v5_head(xs, params, anchors_scaled):
    """Inference-mode forward (training=False, export=False): returns (z, x_list)."""
    z, outs = [], []
    for i, x in enumerate(xs):
        B, _, ny, nx = x.shape
        s = float(STRIDES[i])
        anchor_pix = np.asarray(anchors_scaled[i], np.float32) * s   # (na, 2), pixels
        w, b = params[i]
        raw, dec = _layer_forward(x, w, b, s, anchor_pix)
        # (B, na*no, ny*nx) -> (B, na, ny, nx, no): cheap output layout plumbing
        raw5 = raw.reshape(B, NA, NO, ny, nx).transpose(0, 1, 3, 4, 2)
        dec5 = dec.reshape(B, NA, NO, ny, nx).transpose(0, 1, 3, 4, 2)
        outs.append(raw5)
        z.append(dec5.reshape(B, NA * ny * nx, NO))
    return jnp.concatenate(z, axis=1), outs


# ----------------------------- pure-JAX reference ----------------------------
def reference(xs, params, anchors_scaled):
    z, outs = [], []
    for i in range(NUM_LAYERS):
        w, b = params[i]
        B, cin, ny, nx = xs[i].shape
        out = jnp.einsum('bchw,oc->bohw', xs[i], w.reshape(-1, cin),
                         precision='highest') + b[None, :, None, None]
        out = out.reshape(B, NA, NO, ny, nx).transpose(0, 1, 3, 4, 2)
        outs.append(out)
        y = jax.nn.sigmoid(out)
        yv, xv = jnp.meshgrid(jnp.arange(ny, dtype=jnp.float32),
                              jnp.arange(nx, dtype=jnp.float32), indexing='ij')
        grid = jnp.stack((xv, yv), 2)[None, None] - 0.5
        anchor_grid = (jnp.asarray(anchors_scaled[i]) * STRIDES[i]).reshape(1, NA, 1, 1, 2)
        xy = (y[..., 0:2] * 2 + grid) * STRIDES[i]
        wh = (y[..., 2:4] * 2) ** 2 * anchor_grid
        y = jnp.concatenate([xy, wh, y[..., 4:]], -1)
        z.append(y.reshape(B, -1, NO))
    return jnp.concatenate(z, 1), outs


# ----------------------------- main ------------------------------------------
if __name__ == "__main__":
    key = jax.random.PRNGKey(0)

    anchors_np = np.asarray(ANCHORS, np.float32).reshape(NUM_LAYERS, -1, 2)
    anchors_scaled = anchors_np / np.asarray(STRIDES, np.float32).reshape(-1, 1, 1)
    anchors_scaled = check_anchor_order(anchors_scaled, np.asarray(STRIDES, np.float32))

    key, kp = jax.random.split(key)
    params = init_params(kp)

    # feature maps for a 128x128 input image at strides 8/16/32 (NCHW)
    spatial = [16, 8, 4]
    xs = []
    for i, (c, s) in enumerate(zip(IN_CHS, spatial)):
        key, kx = jax.random.split(key)
        xs.append(jax.random.normal(kx, (2, c, s, s), jnp.float32))

    z, outs = yolo_v5_head(xs, params, anchors_scaled)
    z = jax.block_until_ready(z)
    outs = [jax.block_until_ready(o) for o in outs]

    z_ref, outs_ref = reference(xs, params, anchors_scaled)
    assert z.shape == (2, NA * sum(s * s for s in spatial), NO), z.shape
    np.testing.assert_allclose(np.asarray(z), np.asarray(z_ref), rtol=5e-3, atol=5e-3)
    for o, o_ref in zip(outs, outs_ref):
        np.testing.assert_allclose(np.asarray(o), np.asarray(o_ref), rtol=5e-3, atol=5e-3)

    print("KERNEL_OK")
</pallas_src>

<mosaic_0001>
module attributes {stable_mosaic.version = 11 : i64} {
  func.func @_head_layer_kernel(%arg0: i32, %arg1: i32, %arg2: memref<1x16x256xf32, #tpu.memory_space<vmem>>, %arg3: memref<24x16xf32, #tpu.memory_space<vmem>>, %arg4: memref<24x5xf32, #tpu.memory_space<vmem>>, %arg5: memref<2x256xf32, #tpu.memory_space<vmem>>, %arg6: memref<1x24x256xf32, #tpu.memory_space<vmem>>, %arg7: memref<1x24x256xf32, #tpu.memory_space<vmem>>) attributes {dimension_semantics = [#tpu.dimension_semantics<parallel>, #tpu.dimension_semantics<parallel>], iteration_bounds = array<i64: 2, 1>, scalar_prefetch = 0 : i64, scratch_operands = 0 : i64, tpu.core_type = #tpu.core_type<tc>, window_params = [{transform_indices = @transform_0, window_bounds = array<i64: 1, 16, 256>}, {pipeline_mode = #tpu.pipeline_mode<synchronous>, transform_indices = @transform_1, window_bounds = array<i64: 24, 16>}, {pipeline_mode = #tpu.pipeline_mode<synchronous>, transform_indices = @transform_2, window_bounds = array<i64: 24, 5>}, {transform_indices = @transform_3, window_bounds = array<i64: 2, 256>}, {transform_indices = @transform_4, window_bounds = array<i64: 1, 24, 256>}, {transform_indices = @transform_5, window_bounds = array<i64: 1, 24, 256>}]} {
    %c0 = arith.constant 0 : index
    %c0_0 = arith.constant 0 : index
    %0 = vector.load %arg3[%c0, %c0_0] : memref<24x16xf32, #tpu.memory_space<vmem>>, vector<24x16xf32>
    %c0_1 = arith.constant 0 : index
    %c0_2 = arith.constant 0 : index
    %c0_3 = arith.constant 0 : index
    %1 = vector.load %arg2[%c0_1, %c0_2, %c0_3] : memref<1x16x256xf32, #tpu.memory_space<vmem>>, vector<1x16x256xf32>
    %2 = vector.shape_cast %1 : vector<1x16x256xf32> to vector<16x256xf32>
    %cst = arith.constant dense<0.000000e+00> : vector<24x256xf32>
    %3 = tpu.matmul %0, %2, %cst {dimension_numbers = #tpu.dot_dimension_numbers<[1], [0], [0], [1], [0, 0, 1, 1], [], []>} : vector<24x16xf32>, vector<16x256xf32>, vector<24x256xf32> -> vector<24x256xf32>
    %c0_4 = arith.constant 0 : index
    %c0_5 = arith.constant 0 : index
    %4 = vector.load %arg4[%c0_4, %c0_5] : memref<24x5xf32, #tpu.memory_space<vmem>>, vector<24x1xf32>
    %5 = vector.broadcast %4 : vector<24x1xf32> to vector<24x256xf32>
    %6 = arith.addf %3, %5 : vector<24x256xf32>
    %7 = arith.negf %6 : vector<24x256xf32>
    %8 = math.exp %7 : vector<24x256xf32>
    %cst_6 = arith.constant 1.000000e+00 : f32
    %9 = vector.broadcast %cst_6 : f32 to vector<24x256xf32>
    %10 = arith.addf %9, %8 : vector<24x256xf32>
    %11 = arith.divf %9, %10 : vector<24x256xf32>
    %c0_7 = arith.constant 0 : index
    %c3 = arith.constant 3 : index
    %12 = vector.load %arg4[%c0_7, %c3] : memref<24x5xf32, #tpu.memory_space<vmem>>, vector<24x1xf32>
    %c0_8 = arith.constant 0 : index
    %c0_9 = arith.constant 0 : index
    %13 = vector.load %arg5[%c0_8, %c0_9] : memref<2x256xf32, #tpu.memory_space<vmem>>, vector<1x256xf32>
    %14 = vector.broadcast %12 : vector<24x1xf32> to vector<24x256xf32>
    %15 = vector.broadcast %13 : vector<1x256xf32> to vector<24x256xf32>
    %16 = arith.mulf %14, %15 : vector<24x256xf32>
    %c0_10 = arith.constant 0 : index
    %c4 = arith.constant 4 : index
    %17 = vector.load %arg4[%c0_10, %c4] : memref<24x5xf32, #tpu.memory_space<vmem>>, vector<24x1xf32>
    %c1 = arith.constant 1 : index
    %c0_11 = arith.constant 0 : index
    %18 = vector.load %arg5[%c1, %c0_11] : memref<2x256xf32, #tpu.memory_space<vmem>>, vector<1x256xf32>
    %19 = vector.broadcast %17 : vector<24x1xf32> to vector<24x256xf32>
    %20 = vector.broadcast %18 : vector<1x256xf32> to vector<24x256xf32>
    %21 = arith.mulf %19, %20 : vector<24x256xf32>
    %22 = arith.addf %16, %21 : vector<24x256xf32>
    %c0_12 = arith.constant 0 : index
    %c2 = arith.constant 2 : index
    %23 = vector.load %arg4[%c0_12, %c2] : memref<24x5xf32, #tpu.memory_space<vmem>>, vector<24x1xf32>
    %24 = vector.broadcast %23 : vector<24x1xf32> to vector<24x256xf32>
    %25 = arith.mulf %24, %11 : vector<24x256xf32>
    %c0_13 = arith.constant 0 : index
    %c1_14 = arith.constant 1 : index
    %26 = vector.load %arg4[%c0_13, %c1_14] : memref<24x5xf32, #tpu.memory_space<vmem>>, vector<24x1xf32>
    %27 = vector.broadcast %26 : vector<24x1xf32> to vector<24x256xf32>
    %28 = arith.addf %25, %27 : vector<24x256xf32>
    %29 = arith.mulf %11, %28 : vector<24x256xf32>
    %30 = arith.addf %29, %22 : vector<24x256xf32>
    %c0_15 = arith.constant 0 : index
    %c0_16 = arith.constant 0 : index
    %c0_17 = arith.constant 0 : index
    %31 = vector.load %arg6[%c0_15, %c0_16, %c0_17] : memref<1x24x256xf32, #tpu.memory_space<vmem>>, vector<1x24x256xf32>
    %32 = vector.shape_cast %31 : vector<1x24x256xf32> to vector<24x256xf32>
    %33 = vector.shape_cast %6 : vector<24x256xf32> to vector<1x24x256xf32>
    tpu.vector_store %arg6[%c0_15, %c0_16, %c0_17], %33 {strides = array<i32>} : memref<1x24x256xf32, #tpu.memory_space<vmem>>, vector<1x24x256xf32>,
    %c0_18 = arith.constant 0 : index
    %c0_19 = arith.constant 0 : index
    %c0_20 = arith.constant 0 : index
    %34 = vector.load %arg7[%c0_18, %c0_19, %c0_20] : memref<1x24x256xf32, #tpu.memory_space<vmem>>, vector<1x24x256xf32>
    %35 = vector.shape_cast %34 : vector<1x24x256xf32> to vector<24x256xf32>
    %36 = vector.shape_cast %30 : vector<24x256xf32> to vector<1x24x256xf32>
    tpu.vector_store %arg7[%c0_18, %c0_19, %c0_20], %36 {strides = array<i32>} : memref<1x24x256xf32, #tpu.memory_space<vmem>>, vector<1x24x256xf32>,
    return
  }
  func.func @transform_0(%arg0: i32, %arg1: i32) -> (i32, i32, i32) {
    %c0_i32 = arith.constant 0 : i32
    %c0_i32_0 = arith.constant 0 : i32
    return %arg0, %c0_i32, %arg1 : i32, i32, i32
  }
  func.func @transform_1(%arg0: i32, %arg1: i32) -> (i32, i32) {
    %c0_i32 = arith.constant 0 : i32
    %c0_i32_0 = arith.constant 0 : i32
    %c0_i32_1 = arith.constant 0 : i32
    return %c0_i32, %c0_i32_0 : i32, i32
  }
  func.func @transform_2(%arg0: i32, %arg1: i32) -> (i32, i32) {
    %c0_i32 = arith.constant 0 : i32
    %c0_i32_0 = arith.constant 0 : i32
    %c0_i32_1 = arith.constant 0 : i32
    return %c0_i32, %c0_i32_0 : i32, i32
  }
  func.func @transform_3(%arg0: i32, %arg1: i32) -> (i32, i32) {
    %c0_i32 = arith.constant 0 : i32
    %c0_i32_0 = arith.constant 0 : i32
    return %c0_i32, %arg1 : i32, i32
  }
  func.func @transform_4(%arg0: i32, %arg1: i32) -> (i32, i32, i32) {
    %c0_i32 = arith.constant 0 : i32
    %c0_i32_0 = arith.constant 0 : i32
    return %arg0, %c0_i32, %arg1 : i32, i32, i32
  }
  func.func @transform_5(%arg0: i32, %arg1: i32) -> (i32, i32, i32) {
    %c0_i32 = arith.constant 0 : i32
    %c0_i32_0 = arith.constant 0 : i32
    return %arg0, %c0_i32, %arg1 : i32, i32, i32
  }
}

</mosaic_0001>

<llo_original>
// kernel: tpu_custom_call.1
$region0: #{tpu_custom_call.1}
  #allocation0 [shape = 'u32[]', space=smem, size = 0x4, offset = 0x4, fixed_abs, tag = 'smem constant byte address 0x4 - core index']
  #allocation1 [shape = 'u32[144,128]{1,0:T(1,128)}', space=vmem, size = 0x12000, scoped, tag = 'internal scratch']
  %s0 = inlined_call_operand.vmem [shape: f32[2,16,256], index: 0, kind: input, shape index: {}]
  %s1 = inlined_call_operand.vmem [shape: f32[24,16], index: 1, kind: input, shape index: {}]
  %s2 = inlined_call_operand.vmem [shape: f32[24,5], index: 2, kind: input, shape index: {}]
  %s3 = inlined_call_operand.vmem [shape: f32[2,256], index: 3, kind: input, shape index: {}]
  %s4 = inlined_call_operand.hbm [shape: f32[2,24,256], index: 4, kind: output, shape index: {0}]
  %s5 = inlined_call_operand.hbm [shape: f32[2,24,256], index: 5, kind: output, shape index: {1}]
  %6 = xla_tuple %s4, %s5
  %s7 = sld [smem:[#allocation0]]
  $region57: #{tpu_custom_call.1} parent=0
    _
  %s9 = ssub.s32 1, %s7
  %s10 = scalar_select 0, %s9, %s7
  $region1: #{tpu_custom_call.1} parent=0
    #allocation2 [shape = 'u8[49152]{0}', space=vmem, size = 0xc000, scoped, tag = 'output window, operand 0']
    #allocation3 [shape = 's32[2]{0}', space=sflag, size = 0x8, scoped, tag = 'scoped memory for tpu_custom_call.1']
    #allocation4 [shape = 'u8[49152]{0}', space=vmem, size = 0xc000, scoped, tag = 'output window, operand 1']
    #allocation5 [shape = 's32[2]{0}', space=sflag, size = 0x8, scoped, tag = 'scoped memory for tpu_custom_call.1']
    %11 = vsyncpa [#allocation3], 0
    %s12 = scalar_lea.sflag [#allocation3], 1
    %13 = vsyncpa %s12, 0
    %14 = vsyncpa [#allocation5], 0
    %s15 = scalar_lea.sflag [#allocation5], 1
    %16 = vsyncpa %s15, 0
    loop: start=0, step=1, limit=4
    $region2: #{tpu_custom_call.1} parent=1 // loop_pre_header
      _
    $region3: #{tpu_custom_call.1} parent=1 // loop_header
      %s18 = sphi 0, %s22
      %p19 = scmp.ge.s32.totalorder %s18, 4
      %s25 = sphi 0, %s37
      %s26 = sphi 0, %s33
      %s27 = sphi 0, %s25
      %s28 = sphi 0, %s26
      %s29 = sphi 0, %s27
      %s30 = sphi 0, %s28
      %s42 = sphi 0, %s44
      %s45 = sphi 0, %s42
      %s46 = sphi 0, %s45
      %s62 = sphi 0, %s46
      %s66 = sphi 0, %s66
      %s68 = sphi 0, %s66
      %s69 = sphi 0, %s68
      %s83 = sphi 0, %s69
      %s87 = sphi 0, %s87
      %s89 = sphi 0, %s87
      %s90 = sphi 0, %s89
      %s104 = sphi 0, %s90
      %s110 = sphi 0, %s112
      %s113 = sphi 0, %s110
      %s114 = sphi 0, %s113
      %s130 = sphi 0, %s114
      %s138 = sphi 0, %s140
      %s141 = sphi 0, %s138
      %s142 = sphi 0, %s141
      %s158 = sphi 0, %s142
      %s166 = sphi 0, %s168
      %s169 = sphi 0, %s166
      %s170 = sphi 0, %s169
      %s186 = sphi 0, %s170
    $region4: #{tpu_custom_call.1} parent=1 // loop_header_branch
      %21 = sbr.rel (%p19) target = $region8
    $region5: #{tpu_custom_call.1} parent=1 // loop_body
      %s23 = ssub.s32 %s18, 1
      %s24 = ssub.s32 %s18, 2
      %s31 = sadd.s32 1, %s26
      %p32 = scmp.ge.s32.totalorder %s31, 1
      %s33 = scalar_select %p32, 0, %s31
      %s34 = sadd.s32 1, %s25
      %s35 = scalar_select %p32, %s34, %s25
      %p36 = scmp.ge.s32.totalorder %s35, 2
      %s37 = scalar_select %p36, 0, %s35
      %s38 = ssub.s32 %s25, %s37
      %s39 = ssub.s32 %s26, %s33
      %s40 = sor.u32 %s38, %s39
      %p41 = scmp.eq.s32.totalorder %s40, 0
      %s43 = sadd.s32 %s42, 1
      %s44 = scalar_select %p41, %s42, %s43
      %p47 = pneg %p41
      %p48 = scmp.eq.s32.totalorder %s18, 1
      %p49 = por %p47, %p48
      %p50 = scmp.ne.s32.totalorder %s42, %s45
      %p51 = scmp.eq.s32.totalorder %s18, 0
      %p52 = por %p50, %p51
      %p53 = scmp.ne.s32.totalorder %s42, %s45
      %p54 = scmp.eq.s32.totalorder %s23, 1
      %p55 = por %p53, %p54
      %p56 = scmp.ne.s32.totalorder %s45, %s46
      %p57 = scmp.eq.s32.totalorder %s23, 0
      %p58 = por %p56, %p57
      %p59 = scmp.ne.s32.totalorder %s45, %s46
      %p60 = scmp.eq.s32.totalorder %s24, 1
      %p61 = por %p59, %p60
      %p63 = scmp.ne.s32.totalorder %s46, %s62
      %p64 = scmp.eq.s32.totalorder %s24, 0
      %p65 = por %p63, %p64
      %s67 = sadd.s32 %s66, 1
      %p70 = scmp.eq.s32.totalorder %s18, 1
      %p71 = scmp.ne.s32.totalorder %s66, %s68
      %p72 = scmp.eq.s32.totalorder %s18, 0
      %p73 = por %p71, %p72
      %p74 = scmp.ne.s32.totalorder %s66, %s68
      %p75 = scmp.eq.s32.totalorder %s23, 1
      %p76 = por %p74, %p75
      %p77 = scmp.ne.s32.totalorder %s68, %s69
      %p78 = scmp.eq.s32.totalorder %s23, 0
      %p79 = por %p77, %p78
      %p80 = scmp.ne.s32.totalorder %s68, %s69
      %p81 = scmp.eq.s32.totalorder %s24, 1
      %p82 = por %p80, %p81
      %p84 = scmp.ne.s32.totalorder %s69, %s83
      %p85 = scmp.eq.s32.totalorder %s24, 0
      %p86 = por %p84, %p85
      %s88 = sadd.s32 %s87, 1
      %p91 = scmp.eq.s32.totalorder %s18, 1
      %p92 = scmp.ne.s32.totalorder %s87, %s89
      %p93 = scmp.eq.s32.totalorder %s18, 0
      %p94 = por %p92, %p93
      %p95 = scmp.ne.s32.totalorder %s87, %s89
      %p96 = scmp.eq.s32.totalorder %s23, 1
      %p97 = por %p95, %p96
      %p98 = scmp.ne.s32.totalorder %s89, %s90
      %p99 = scmp.eq.s32.totalorder %s23, 0
      %p100 = por %p98, %p99
      %p101 = scmp.ne.s32.totalorder %s89, %s90
      %p102 = scmp.eq.s32.totalorder %s24, 1
      %p103 = por %p101, %p102
      %p105 = scmp.ne.s32.totalorder %s90, %s104
      %p106 = scmp.eq.s32.totalorder %s24, 0
      %p107 = por %p105, %p106
      %s108 = ssub.s32 %s26, %s33
      %p109 = scmp.eq.s32.totalorder %s108, 0
      %s111 = sadd.s32 %s110, 1
      %s112 = scalar_select %p109, %s110, %s111
      %p115 = pneg %p109
      %p116 = scmp.eq.s32.totalorder %s18, 1
      %p117 = por %p115, %p116
      %p118 = scmp.ne.s32.totalorder %s110, %s113
      %p119 = scmp.eq.s32.totalorder %s18, 0
      %p120 = por %p118, %p119
      %p121 = scmp.ne.s32.totalorder %s110, %s113
      %p122 = scmp.eq.s32.totalorder %s23, 1
      %p123 = por %p121, %p122
      %p124 = scmp.ne.s32.totalorder %s113, %s114
      %p125 = scmp.eq.s32.totalorder %s23, 0
      %p126 = por %p124, %p125
      %p127 = scmp.ne.s32.totalorder %s113, %s114
      %p128 = scmp.eq.s32.totalorder %s24, 1
      %p129 = por %p127, %p128
      %p131 = scmp.ne.s32.totalorder %s114, %s130
      %p132 = scmp.eq.s32.totalorder %s24, 0
      %p133 = por %p131, %p132
      %s134 = ssub.s32 %s25, %s37
      %s135 = ssub.s32 %s26, %s33
      %s136 = sor.u32 %s134, %s135
      %p137 = scmp.eq.s32.totalorder %s136, 0
      %s139 = sadd.s32 %s138, 1
      %s140 = scalar_select %p137, %s138, %s139
      %p143 = pneg %p137
      %p144 = scmp.eq.s32.totalorder %s18, 1
      %p145 = por %p143, %p144
      %p146 = scmp.ne.s32.totalorder %s138, %s141
      %p147 = scmp.eq.s32.totalorder %s18, 0
      %p148 = por %p146, %p147
      %p149 = scmp.ne.s32.totalorder %s138, %s141
      %p150 = scmp.eq.s32.totalorder %s23, 1
      %p151 = por %p149, %p150
      %p152 = scmp.ne.s32.totalorder %s141, %s142
      %p153 = scmp.eq.s32.totalorder %s23, 0
      %p154 = por %p152, %p153
      %p155 = scmp.ne.s32.totalorder %s141, %s142
      %p156 = scmp.eq.s32.totalorder %s24, 1
      %p157 = por %p155, %p156
      %p159 = scmp.ne.s32.totalorder %s142, %s158
      %p160 = scmp.eq.s32.totalorder %s24, 0
      %p161 = por %p159, %p160
      %s162 = ssub.s32 %s25, %s37
      %s163 = ssub.s32 %s26, %s33
      %s164 = sor.u32 %s162, %s163
      %p165 = scmp.eq.s32.totalorder %s164, 0
      %s167 = sadd.s32 %s166, 1
      %s168 = scalar_select %p165, %s166, %s167
      %p171 = pneg %p165
      %p172 = scmp.eq.s32.totalorder %s18, 1
      %p173 = por %p171, %p172
      %p174 = scmp.ne.s32.totalorder %s166, %s169
      %p175 = scmp.eq.s32.totalorder %s18, 0
      %p176 = por %p174, %p175
      %p177 = scmp.ne.s32.totalorder %s166, %s169
      %p178 = scmp.eq.s32.totalorder %s23, 1
      %p179 = por %p177, %p178
      %p180 = scmp.ne.s32.totalorder %s169, %s170
      %p181 = scmp.eq.s32.totalorder %s23, 0
      %p182 = por %p180, %p181
      %p183 = scmp.ne.s32.totalorder %s169, %s170
      %p184 = scmp.eq.s32.totalorder %s24, 1
      %p185 = por %p183, %p184
      %p187 = scmp.ne.s32.totalorder %s170, %s186
      %p188 = scmp.eq.s32.totalorder %s24, 0
      %p189 = por %p187, %p188
      %p190 = scmp.le.s32.totalorder 1, %s18
      %p191 = scmp.lt.s32.totalorder %s18, 3
      %p192 = pnand %p190, %p191
      %p193 = pneg %p192
      // Predicated region
      $region9: #{tpu_custom_call.1} parent=5 // pred_check
        _
      $region10: #{tpu_custom_call.1} parent=5 // pred_check_branch
        %195 = sbr.rel (%p192) target = $region12
      $region11: #{tpu_custom_call.1} parent=5 // pred_region
        %s196 = ssub.s32 %s18, 1
        // Predicated region
        $region13: #{tpu_custom_call.1} parent=11 // pred_check
          %p197 = pneg %p79
        $region14: #{tpu_custom_call.1} parent=11 // pred_check_branch
          %199 = sbr.rel (%p197) target = $region16
        $region15: #{tpu_custom_call.1} parent=11 // pred_region
          _
        $region16: #{tpu_custom_call.1} parent=11 // pred_fallthru
          _
        // Predicated region
        $region17: #{tpu_custom_call.1} parent=11 // pred_check
          %p200 = pneg %p100
        $region18: #{tpu_custom_call.1} parent=11 // pred_check_branch
          %202 = sbr.rel (%p200) target = $region20
        $region19: #{tpu_custom_call.1} parent=11 // pred_region
          _
        $region20: #{tpu_custom_call.1} parent=11 // pred_fallthru
          _
        // Predicated region
        $region21: #{tpu_custom_call.1} parent=11 // pred_check
          %p203 = pneg %p126
        $region22: #{tpu_custom_call.1} parent=11 // pred_check_branch
          %205 = sbr.rel (%p203) target = $region24
        $region23: #{tpu_custom_call.1} parent=11 // pred_region
          %s206 = smul.u32 2, %s28
          %p207 = scmp.lt.s32.totalorder %s206, 1
          %s208 = scalar_select %p207, %s206, 1
          %s209 = smul.addr %s208, 2
          %s210 = scalar_lea.vmem %s3, %s209
          %s211 = smul.u32 2, %s28
        $region24: #{tpu_custom_call.1} parent=11 // pred_fallthru
          _
      $region12: #{tpu_custom_call.1} parent=5 // pred_fallthru
        _
      %p212 = scmp.lt.s32.totalorder %s18, 2
      // Predicated region
      $region25: #{tpu_custom_call.1} parent=5 // pred_check
        %p213 = pneg %p212
      $region26: #{tpu_custom_call.1} parent=5 // pred_check_branch
        %215 = sbr.rel (%p213) target = $region28
      $region27: #{tpu_custom_call.1} parent=5 // pred_region
        // Predicated region
        $region29: #{tpu_custom_call.1} parent=27 // pred_check
          %p216 = pneg %p52
        $region30: #{tpu_custom_call.1} parent=27 // pred_check_branch
          %218 = sbr.rel (%p216) target = $region32
        $region31: #{tpu_custom_call.1} parent=27 // pred_region
          %s219 = smul.u32 2, %s26
          %p220 = scmp.lt.s32.totalorder %s25, 1
          %s221 = scalar_select %p220, %s25, 1
          %p222 = scmp.lt.s32.totalorder %s219, 1
          %s223 = scalar_select %p222, %s219, 1
          %s224 = smul.addr %s221, 4
          %s225 = sadd.s32 %s223, %s224
          %s226 = smul.addr %s225, 8
          %s227 = scalar_lea.vmem %s0, %s226
          %s228 = smul.u32 2, %s26
        $region32: #{tpu_custom_call.1} parent=27 // pred_fallthru
          _
      $region28: #{tpu_custom_call.1} parent=5 // pred_fallthru
        _
      %p229 = scmp.le.s32.totalorder 1, %s18
      %p230 = scmp.lt.s32.totalorder %s18, 3
      %p231 = pnand %p229, %p230
      %p232 = pneg %p231
      // Predicated region
      $region33: #{tpu_custom_call.1} parent=5 // pred_check
        _
      $region34: #{tpu_custom_call.1} parent=5 // pred_check_branch
        %234 = sbr.rel (%p231) target = $region36
      $region35: #{tpu_custom_call.1} parent=5 // pred_region
        %s235 = ssub.s32 %s18, 1
        %s236 = smul.u32 2, %s28
        %p237 = scmp.lt.s32.totalorder %s27, 1
        %s238 = scalar_select %p237, %s27, 1
        %p239 = scmp.lt.s32.totalorder %s236, 1
        %s240 = scalar_select %p239, %s236, 1
        %s241 = smul.addr %s238, 4
        %s242 = sadd.s32 %s240, %s241
        %s243 = smul.addr %s242, 8
        %s244 = scalar_lea.vmem %s0, %s243
        %p245 = pneg %p58
        %p246 = pneg %p55
        %p247 = pneg %p79
        %p248 = pneg %p76
        %p249 = pneg %p100
        %p250 = pneg %p97
        %s251 = smul.u32 2, %s28
        %p252 = scmp.lt.s32.totalorder %s251, 1
        %s253 = scalar_select %p252, %s251, 1
        %s254 = smul.addr %s253, 2
        %s255 = scalar_lea.vmem %s3, %s254
        %p256 = pneg %p126
        %p257 = pneg %p123
        %p258 = pneg %p154
        %p259 = pneg %p151
        %s260 = sand.u32 %s141, 1
        %s261 = scalar_lea.sflag [#allocation3], %s260
        %s262 = sand.u32 %s141, 1
        %s263 = smul.addr %s262, 48
        %s264 = scalar_lea.vmem [#allocation2], %s263
        %p265 = pneg %p182
        %p266 = pneg %p179
        %s267 = sand.u32 %s169, 1
        %s268 = scalar_lea.sflag [#allocation5], %s267
        %s269 = sand.u32 %s169, 1
        %s270 = smul.addr %s269, 48
        %s271 = scalar_lea.vmem [#allocation4], %s270
        %s272 = smul.u32 2, %s28
        %p273 = scmp.lt.s32.totalorder %s27, 1
        %s274 = scalar_select %p273, %s27, 1
        %p275 = scmp.lt.s32.totalorder %s272, 1
        %s276 = scalar_select %p275, %s272, 1
        %s277 = smul.addr %s274, 4
        %s278 = sadd.s32 %s276, %s277
        %s279 = smul.addr %s278, 8
        %s280 = scalar_lea.vmem %s0, %s279
        %s281 = smul.u32 2, %s28
        %s282 = smul.u32 2, %s28
        %p283 = scmp.lt.s32.totalorder %s282, 1
        %s284 = scalar_select %p283, %s282, 1
        %s285 = smul.addr %s284, 2
        %s286 = scalar_lea.vmem %s3, %s285
        %s287 = smul.u32 2, %s28
        %s288 = smul.u32 2, %s28
        %s289 = smul.u32 2, %s28
        %v290 = vld [vmem:[%s1] sm:$0xff]
        %v291 = vld [vmem:[%s1 + $0x8] sm:$0xff]
        %v292 = vld [vmem:[%s1 + $0x10] sm:$0xff]
        %v293 = vld [vmem:[%s280] sm:$0xff]
        %v294 = vld [vmem:[%s280 + $0x8] sm:$0xff]
        %v295 = vld [vmem:[%s280 + $0x10] sm:$0xff]
        %v296 = vld [vmem:[%s280 + $0x18] sm:$0xff]
        %v297 = vld [vmem:[%s2] sm:$0xff]
        %v298 = vld [vmem:[%s2 + $0x8] sm:$0xff]
        %v299 = vld [vmem:[%s2 + $0x10] sm:$0xff]
        %301 = vset.pattern.permute.xlu0 0
        %302 = vperm.xlu0 %301, %v297
        %v303 = vpop.permute.xlu0 %302
        %306 = vset.pattern.permute.xlu0 0
        %307 = vperm.xlu0 %306, %v298
        %v308 = vpop.permute.xlu0 %307
        %311 = vset.pattern.permute.xlu0 0
        %312 = vperm.xlu0 %311, %v299
        %v313 = vpop.permute.xlu0 %312
        %vm315 = vcmask 130048
        %v317 = vsel %vm315, %v290, 0
        %v320 = vsel %vm315, %v291, 0
        %v323 = vsel %vm315, %v292, 0
        %325 = vmatprep.subr.mxu0 %v294
        %326 = vmatpush1.msra.mxu0 %v293
        %327 = vmatprep.subr.mxu0 %v296
        %328 = vmatpush1.msra.mxu0 %v295
        %329 = vmatprep.subr.mxu0 0.0
        %330 = vmatpush1.msra.mxu0 0.0
        %331 = vmatprep.subr.mxu0 0.0
        %332 = vmatpush1.msra.mxu0 0.0
        %333 = vmatprep.subr.mxu0 0.0
        %334 = vmatpush1.msra.mxu0 0.0
        %335 = vmatprep.subr.mxu0 0.0
        %336 = vmatpush1.msra.mxu0 0.0
        %337 = vmatprep.subr.mxu0 0.0
        %338 = vmatpush1.msra.mxu0 0.0
        %339 = vmatprep.subr.mxu0 0.0
        %340 = vmatpush1.msra.mxu0 0.0
        %341 = vmatprep.subr.mxu0 0.0
        %342 = vmatpush1.msra.mxu0 0.0
        %343 = vmatprep.subr.mxu0 0.0
        %344 = vmatpush1.msra.mxu0 0.0
        %345 = vmatprep.subr.mxu0 0.0
        %346 = vmatpush1.msra.mxu0 0.0
        %347 = vmatprep.subr.mxu0 0.0
        %348 = vmatpush1.msra.mxu0 0.0
        %349 = vmatprep.subr.mxu0 0.0
        %350 = vmatpush1.msra.mxu0 0.0
        %351 = vmatprep.subr.mxu0 0.0
        %352 = vmatpush1.msra.mxu0 0.0
        %353 = vmatprep.subr.mxu0 0.0
        %354 = vmatpush1.msra.mxu0 0.0
        %355 = vmatprep.subr.mxu0 0.0
        %356 = vmatpush1.msra.mxu0 0.0
        %357 = vmatprep.subr.mxu0 0.0
        %358 = vmatpush1.msra.mxu0 0.0
        %359 = vmatprep.subr.mxu0 0.0
        %360 = vmatpush1.msra.mxu0 0.0
        %361 = vmatprep.subr.mxu0 0.0
        %362 = vmatpush1.msra.mxu0 0.0
        %363 = vmatprep.subr.mxu0 0.0
        %364 = vmatpush1.msra.mxu0 0.0
        %365 = vmatprep.subr.mxu0 0.0
        %366 = vmatpush1.msra.mxu0 0.0
        %367 = vmatprep.subr.mxu0 0.0
        %368 = vmatpush1.msra.mxu0 0.0
        %369 = vmatprep.subr.mxu0 0.0
        %370 = vmatpush1.msra.mxu0 0.0
        %371 = vmatprep.subr.mxu0 0.0
        %372 = vmatpush1.msra.mxu0 0.0
        %373 = vmatprep.subr.mxu0 0.0
        %374 = vmatpush1.msra.mxu0 0.0
        %375 = vmatprep.subr.mxu0 0.0
        %376 = vmatpush1.msra.mxu0 0.0
        %377 = vmatprep.subr.mxu0 0.0
        %378 = vmatpush1.msra.mxu0 0.0
        %379 = vmatprep.subr.mxu0 0.0
        %380 = vmatpush1.msra.mxu0 0.0
        %381 = vmatprep.subr.mxu0 0.0
        %382 = vmatpush1.msra.mxu0 0.0
        %383 = vmatprep.subr.mxu0 0.0
        %384 = vmatpush1.msra.mxu0 0.0
        %385 = vmatprep.subr.mxu0 0.0
        %386 = vmatpush1.msra.mxu0 0.0
        %387 = vmatprep.subr.mxu0 0.0
        %388 = vmatpush1.msra.mxu0 0.0
        %389 = vmatprep.mubr.f32.mxu0 0.0
        %390 = vmatmul.mubr.f32.gmra.mrb[0].mxu0 %v317
        %v391 = vpop.f32.mrb[0].mxu0
        %v392 = vadd.f32 %v303, %v391
        %v393 = vpop.f32.mrb[0].mxu0
        %v394 = vadd.f32 %v303, %v393
        %395 = vmatprep.mubr.f32.mxu0 0.0
        %396 = vmatmul.mubr.f32.gmra.mrb[0].mxu0 %v320
        %v397 = vpop.f32.mrb[0].mxu0
        %v398 = vadd.f32 %v308, %v397
        %v399 = vpop.f32.mrb[0].mxu0
        %v400 = vadd.f32 %v308, %v399
        %401 = vmatprep.mubr.f32.mxu0 0.0
        %402 = vmatmul.mubr.f32.gmra.mrb[0].mxu0 %v323
        %v403 = vpop.f32.mrb[0].mxu0
        %v404 = vadd.f32 %v313, %v403
        %v405 = vpop.f32.mrb[0].mxu0
        %v406 = vadd.f32 %v313, %v405
        %407 = vdwg.mxu0
        %v408 = vxor.u32 %v392, 2147483648
        %v409 = vxor.u32 %v394, 2147483648
        %v410 = vxor.u32 %v398, 2147483648
        %v411 = vxor.u32 %v400, 2147483648
        %v412 = vxor.u32 %v404, 2147483648
        %v413 = vxor.u32 %v406, 2147483648
        %v414 = vmul.f32 %v408, 1.442695
        %v415 = vpow.pop %v414
        %v416 = vmul.f32 %v409, 1.442695
        %v417 = vpow.pop %v416
        %v418 = vmul.f32 %v410, 1.442695
        %v419 = vpow.pop %v418
        %v420 = vmul.f32 %v411, 1.442695
        %v421 = vpow.pop %v420
        %v422 = vmul.f32 %v412, 1.442695
        %v423 = vpow.pop %v422
        %v424 = vmul.f32 %v413, 1.442695
        %v425 = vpow.pop %v424
        %v426 = vadd.f32 %v415, 1.0
        %v427 = vadd.f32 %v417, 1.0
        %v428 = vadd.f32 %v419, 1.0
        %v429 = vadd.f32 %v421, 1.0
        %v430 = vadd.f32 %v423, 1.0
        %v431 = vadd.f32 %v425, 1.0
        %v432 = vrcp.pop %v426
        %v433 = vmul.f32 1.0, %v432
        %v434 = vrcp.pop %v427
        %v435 = vmul.f32 1.0, %v434
        %v436 = vrcp.pop %v428
        %v437 = vmul.f32 1.0, %v436
        %v438 = vrcp.pop %v429
        %v439 = vmul.f32 1.0, %v438
        %v440 = vrcp.pop %v430
        %v441 = vmul.f32 1.0, %v440
        %v442 = vrcp.pop %v431
        %v443 = vmul.f32 1.0, %v442
        %v444 = vld [vmem:[%s286] ss:$2 sm:$0x3]
        %445 = vset.pattern.permute.xlu0 3
        %446 = vperm.xlu0 %445, %v297
        %v447 = vpop.permute.xlu0 %446
        %449 = vset.pattern.permute.xlu0 3
        %450 = vperm.xlu0 %449, %v298
        %v451 = vpop.permute.xlu0 %450
        %453 = vset.pattern.permute.xlu0 3
        %454 = vperm.xlu0 %453, %v299
        %v455 = vpop.permute.xlu0 %454
        %v458 = vlaneseq
        %v459 = vshrl.u32 %v458, 7
        %v460 = vsub.s32 0, %v459
        %v461 = vrot.slane %v444, %v460
        %v462 = vlaneseq
        %v463 = vshrl.u32 %v462, 7
        %v464 = vsub.s32 1, %v463
        %v465 = vrot.slane %v444, %v464
        %v468 = vmul.f32 %v447, %v461
        %v469 = vmul.f32 %v447, %v465
        %v470 = vmul.f32 %v451, %v461
        %v471 = vmul.f32 %v451, %v465
        %v472 = vmul.f32 %v455, %v461
        %v473 = vmul.f32 %v455, %v465
        %s474 = scalar_lea.vmem %s286, 1
        %v475 = vld [vmem:[%s474] ss:$2 sm:$0x3]
        %476 = vset.pattern.permute.xlu0 4
        %477 = vperm.xlu0 %476, %v297
        %v478 = vpop.permute.xlu0 %477
        %480 = vset.pattern.permute.xlu0 4
        %481 = vperm.xlu0 %480, %v298
        %v482 = vpop.permute.xlu0 %481
        %484 = vset.pattern.permute.xlu0 4
        %485 = vperm.xlu0 %484, %v299
        %v486 = vpop.permute.xlu0 %485
        %v489 = vlaneseq
        %v490 = vshrl.u32 %v489, 7
        %v491 = vsub.s32 0, %v490
        %v492 = vrot.slane %v475, %v491
        %v493 = vlaneseq
        %v494 = vshrl.u32 %v493, 7
        %v495 = vsub.s32 1, %v494
        %v496 = vrot.slane %v475, %v495
        %v499 = vmul.f32 %v478, %v492
        %v500 = vmul.f32 %v478, %v496
        %v501 = vmul.f32 %v482, %v492
        %v502 = vmul.f32 %v482, %v496
        %v503 = vmul.f32 %v486, %v492
        %v504 = vmul.f32 %v486, %v496
        %v505 = vadd.f32 %v468, %v499
        %v506 = vadd.f32 %v469, %v500
        %v507 = vadd.f32 %v470, %v501
        %v508 = vadd.f32 %v471, %v502
        %v509 = vadd.f32 %v472, %v503
        %v510 = vadd.f32 %v473, %v504
        %511 = vset.pattern.permute.xlu0 2
        %512 = vperm.xlu0 %511, %v297
        %v513 = vpop.permute.xlu0 %512
        %515 = vset.pattern.permute.xlu0 2
        %516 = vperm.xlu0 %515, %v298
        %v517 = vpop.permute.xlu0 %516
        %519 = vset.pattern.permute.xlu0 2
        %520 = vperm.xlu0 %519, %v299
        %v521 = vpop.permute.xlu0 %520
        %v523 = vmul.f32 %v513, %v433
        %v524 = vmul.f32 %v513, %v435
        %v525 = vmul.f32 %v517, %v437
        %v526 = vmul.f32 %v517, %v439
        %v527 = vmul.f32 %v521, %v441
        %v528 = vmul.f32 %v521, %v443
        %529 = vset.pattern.permute.xlu0 1
        %530 = vperm.xlu0 %529, %v297
        %v531 = vpop.permute.xlu0 %530
        %533 = vset.pattern.permute.xlu0 1
        %534 = vperm.xlu0 %533, %v298
        %v535 = vpop.permute.xlu0 %534
        %537 = vset.pattern.permute.xlu0 1
        %538 = vperm.xlu0 %537, %v299
        %v539 = vpop.permute.xlu0 %538
        %v541 = vadd.f32 %v523, %v531
        %v542 = vadd.f32 %v524, %v531
        %v543 = vadd.f32 %v525, %v535
        %v544 = vadd.f32 %v526, %v535
        %v545 = vadd.f32 %v527, %v539
        %v546 = vadd.f32 %v528, %v539
        %v547 = vmul.f32 %v433, %v541
        %v548 = vmul.f32 %v435, %v542
        %v549 = vmul.f32 %v437, %v543
        %v550 = vmul.f32 %v439, %v544
        %v551 = vmul.f32 %v441, %v545
        %v552 = vmul.f32 %v443, %v546
        %v553 = vadd.f32 %v547, %v505
        %v554 = vadd.f32 %v548, %v506
        %v555 = vadd.f32 %v549, %v507
        %v556 = vadd.f32 %v550, %v508
        %v557 = vadd.f32 %v551, %v509
        %v558 = vadd.f32 %v552, %v510
        %559 = vst [vmem:[%s264] sm:$0xff] %v392
        %560 = vst [vmem:[%s264 + $0x8] sm:$0xff] %v394
        %561 = vst [vmem:[%s264 + $0x10] sm:$0xff] %v398
        %562 = vst [vmem:[%s264 + $0x18] sm:$0xff] %v400
        %563 = vst [vmem:[%s264 + $0x20] sm:$0xff] %v404
        %564 = vst [vmem:[%s264 + $0x28] sm:$0xff] %v406
        %565 = vst [vmem:[%s271] sm:$0xff] %v553
        %566 = vst [vmem:[%s271 + $0x8] sm:$0xff] %v554
        %567 = vst [vmem:[%s271 + $0x10] sm:$0xff] %v555
        %568 = vst [vmem:[%s271 + $0x18] sm:$0xff] %v556
        %569 = vst [vmem:[%s271 + $0x20] sm:$0xff] %v557
        %570 = vst [vmem:[%s271 + $0x28] sm:$0xff] %v558
        %s571 = sand.u32 %s141, 1
        %s572 = scalar_lea.sflag [#allocation3], %s571
        %s573 = sand.u32 %s141, 1
        %s574 = smul.addr %s573, 48
        %s575 = scalar_lea.vmem [#allocation2], %s574
        %s576 = sand.u32 %s169, 1
        %s577 = scalar_lea.sflag [#allocation5], %s576
        %s578 = sand.u32 %s169, 1
        %s579 = smul.addr %s578, 48
        %s580 = scalar_lea.vmem [#allocation4], %s579
        // Predicated region
        $region37: #{tpu_custom_call.1} parent=35 // pred_check
          %p581 = pneg %p151
        $region38: #{tpu_custom_call.1} parent=35 // pred_check_branch
          %583 = sbr.rel (%p581) target = $region40
        $region39: #{tpu_custom_call.1} parent=35 // pred_region
          %s584 = smul.u32 2, %s28
          %s586 = ssub.s32 768, 768
          %587 = vsyncadd %s572, %s586
          %s588 = smul.addr %s27, 6
          %s589 = sadd.s32 %s584, %s588
          %s590 = smul.addr %s589, 128
          %s591 = scalar_lea.hbm %s4, %s590
          %s592 = sshll.u32 %s575, 4
          %s593 = int_to_ptr.vmem [resolvable:$true] %s592
          %598 = dma.vmem_to_hbm [thread:$0]  %s593, 768, %s591, %s572, 256, 256, 16
        $region40: #{tpu_custom_call.1} parent=35 // pred_fallthru
          _
        // Predicated region
        $region41: #{tpu_custom_call.1} parent=35 // pred_check
          %p599 = pneg %p179
        $region42: #{tpu_custom_call.1} parent=35 // pred_check_branch
          %601 = sbr.rel (%p599) target = $region44
        $region43: #{tpu_custom_call.1} parent=35 // pred_region
          %s602 = smul.u32 2, %s28
          %s604 = ssub.s32 768, 768
          %605 = vsyncadd %s577, %s604
          %s606 = smul.addr %s27, 6
          %s607 = sadd.s32 %s602, %s606
          %s608 = smul.addr %s607, 128
          %s609 = scalar_lea.hbm %s5, %s608
          %s610 = sshll.u32 %s580, 4
          %s611 = int_to_ptr.vmem [resolvable:$true] %s610
          %616 = dma.vmem_to_hbm [thread:$0]  %s611, 768, %s609, %s577, 256, 256, 16
        $region44: #{tpu_custom_call.1} parent=35 // pred_fallthru
          _
      $region36: #{tpu_custom_call.1} parent=5 // pred_fallthru
        _
      %p617 = scmp.le.s32.totalorder 2, %s18
      // Predicated region
      $region45: #{tpu_custom_call.1} parent=5 // pred_check
        %p618 = pneg %p617
      $region46: #{tpu_custom_call.1} parent=5 // pred_check_branch
        %620 = sbr.rel (%p618) target = $region48
      $region47: #{tpu_custom_call.1} parent=5 // pred_region
        %s621 = ssub.s32 %s18, 2
        // Predicated region
        $region49: #{tpu_custom_call.1} parent=47 // pred_check
          %p622 = pneg %p157
        $region50: #{tpu_custom_call.1} parent=47 // pred_check_branch
          %624 = sbr.rel (%p622) target = $region52
        $region51: #{tpu_custom_call.1} parent=47 // pred_region
          %s625 = sand.u32 %s142, 1
          %s626 = scalar_lea.sflag [#allocation3], %s625
          %s627 = sand.u32 %s142, 1
          %s628 = smul.addr %s627, 48
          %s629 = scalar_lea.vmem [#allocation2], %s628
          %630 = dma.done %s626, 768
        $region52: #{tpu_custom_call.1} parent=47 // pred_fallthru
          _
        // Predicated region
        $region53: #{tpu_custom_call.1} parent=47 // pred_check
          %p631 = pneg %p185
        $region54: #{tpu_custom_call.1} parent=47 // pred_check_branch
          %633 = sbr.rel (%p631) target = $region56
        $region55: #{tpu_custom_call.1} parent=47 // pred_region
          %s634 = sand.u32 %s170, 1
          %s635 = scalar_lea.sflag [#allocation5], %s634
          %s636 = sand.u32 %s170, 1
          %s637 = smul.addr %s636, 48
          %s638 = scalar_lea.vmem [#allocation4], %s637
          %639 = dma.done %s635, 768
        $region56: #{tpu_custom_call.1} parent=47 // pred_fallthru
          _
      $region48: #{tpu_custom_call.1} parent=5 // pred_fallthru
        _
    $region6: #{tpu_custom_call.1} parent=1 // loop_footer
      %s22 = sadd.s32 1, %s18
    $region7: #{tpu_custom_call.1} parent=1 // loop_footer_branch
      %17 = sbr.rel target = $region3
    $region8: #{tpu_custom_call.1} parent=1 // loop_exit
      _
    %640 = vsyncpa [#allocation3], 1
    %s641 = scalar_lea.sflag [#allocation3], 1
    %642 = vsyncpa %s641, 1
    %643 = vsyncpa [#allocation5], 1
    %s644 = scalar_lea.sflag [#allocation5], 1
    %645 = vsyncpa %s644, 1

</llo_original>
